<compile_context>
chip_gen: v5e
topology: v5e:2x2
jax: 0.10.0
libtpu: 0.0.40
codegen_flags: <defaults>
</compile_context>

<pallas_src>
import jax
import jax.numpy as jnp
from jax.experimental import pallas as pl
from jax.experimental.pallas import tpu as pltpu

LANES = 128


# ----------------------------------------------------------------------------
# EDiceLoss partial-sum kernel
# ----------------------------------------------------------------------------
def _dice_partial_kernel(seg_ref, tgt_ref, out_ref):
    # seg_ref/tgt_ref: (1, 1, TH, W) tile of one channel.  Cast in-kernel so
    # bf16 / int8 inputs can be passed straight through (halves HBM traffic
    # when the producer already emits narrow dtypes); accumulate in f32.
    p = jax.nn.sigmoid(seg_ref[...].astype(jnp.float32))
    t = tgt_ref[...].astype(jnp.float32)
    inter = jnp.sum(p * t)
    p2 = jnp.sum(p * p)
    t2 = jnp.sum(t * t)
    # Pack the three partial sums into a lane-dense (3, 128) block:
    # sublane 0 = intersection, 1 = sum(p^2), 2 = sum(t^2).
    sub = jax.lax.broadcasted_iota(jnp.int32, (1, 1, 3, LANES), 2)
    out_ref[...] = jnp.where(sub == 0, inter, jnp.where(sub == 1, p2, t2))


def _choose_row_tile(h, w, target_bytes=2 << 20):
    """Largest multiple-of-8 divisor of `h` whose (th, w) f32 tile stays under
    ~target_bytes per pipeline buffer; falls back to the full extent (always a
    legal block) when no such divisor exists."""
    max_th = max(1, target_bytes // max(1, w * 4))
    best = None
    for th in range(8, min(h, max_th) + 1, 8):
        if h % th == 0:
            best = th
    return best if best is not None else h


def edice_loss(seg_input, seg_target, smooth=1.0):
    B, C, H, W = seg_input.shape
    TH = _choose_row_tile(H, W)
    HT = H // TH
    T = B * HT

    partials = pl.pallas_call(
        _dice_partial_kernel,
        out_shape=jax.ShapeDtypeStruct((C, T, 3, LANES), jnp.float32),
        grid=(C, B, HT),
        in_specs=[pl.BlockSpec((1, 1, TH, W), lambda c, b, h: (b, c, h, 0)),
                  pl.BlockSpec((1, 1, TH, W), lambda c, b, h: (b, c, h, 0))],
        out_specs=pl.BlockSpec((1, 1, 3, LANES),
                               lambda c, b, h: (c, b * HT + h, 0, 0)),
        compiler_params=pltpu.CompilerParams(
            dimension_semantics=("parallel", "parallel", "parallel")),
    )(seg_input, seg_target)

    # Tiny host-side combine (fused by XLA): sum partials over spatial tiles,
    # then the nonlinear dice formula once per channel.
    per_channel = jnp.sum(partials[..., 0], axis=1)          # (C, 3)
    inter, p2, t2 = per_channel[:, 0], per_channel[:, 1], per_channel[:, 2]
    dice = (2.0 * inter + smooth) / (p2 + t2 + smooth)
    return jnp.mean(1.0 - dice)


# ----------------------------------------------------------------------------
# MSE_with_alive2 + Type_loss: ~1 KiB of data -> plain JAX (no pallas_call).
# Dynamic boolean-index gathers are replaced by masked reductions; the
# `if count != 0` guards in PyTorch map to sum(mask*val)/max(count, 1).
# ----------------------------------------------------------------------------
def survival_losses(sur_inputs, sur_target, alive, pseudo, type_logits):
    x = sur_inputs.reshape(-1).astype(jnp.float32)     # inputs.reshape(N)
    t = sur_target.astype(jnp.float32)
    alive = alive.astype(jnp.float32)
    pseudo = pseudo.astype(jnp.float32)

    valid = ((pseudo == 2) & ((x < t) | (alive == 0))).astype(jnp.float32)
    pmask = (pseudo == 1).astype(jnp.float32)

    def masked_mean(vals, mask):
        return jnp.sum(vals * mask) / jnp.maximum(jnp.sum(mask), 1.0)

    # --- MSE_with_alive2: loss_true + 0.5 * loss_pseudo ---------------------
    sq = (x - t) * (x - t)
    loss_mse = masked_mean(sq, valid) + 0.5 * masked_mean(sq, pmask)

    # --- Type_loss: soft-label CE with one-hot from target-time bins --------
    one_hot = jnp.stack([(t >= 0.0) & (t < 300.0),
                         (t >= 300.0) & (t < 450.0),
                         t >= 450.0], axis=1).astype(jnp.float32)      # (N, 3)
    logp = jax.nn.log_softmax(type_logits.astype(jnp.float32), axis=1)
    ce = -jnp.sum(one_hot * logp, axis=1)                              # (N,)
    loss_type = masked_mean(ce, valid) + 0.5 * masked_mean(ce, pmask)
    return loss_mse, loss_type


# ----------------------------------------------------------------------------
# Fuse_Loss.forward  (type is not None branch)
# ----------------------------------------------------------------------------
@jax.jit
def fuse_loss(seg_input, seg_target, sur_inputs, sur_target, type_logits,
              sur_target_label, alive, bins, pseudo, weight):
    # sur_target_label and bins are unused by this forward path (kept for
    # signature fidelity with the PyTorch module).
    loss_mse, loss_type = survival_losses(sur_inputs, sur_target, alive,
                                          pseudo, type_logits)
    loss_ed = edice_loss(seg_input, seg_target)
    loss = loss_mse * weight[1] + loss_ed * weight[2] + loss_type * weight[0]
    return loss, loss_mse, loss_ed, loss_type


# ----------------------------------------------------------------------------
# Pure-JAX reference for verification
# ----------------------------------------------------------------------------
def _ref_fuse_loss(seg_input, seg_target, sur_inputs, sur_target, type_logits,
                   alive, pseudo, weight):
    p = jax.nn.sigmoid(seg_input.astype(jnp.float32))
    t = seg_target.astype(jnp.float32)
    C = seg_target.shape[1]
    dices = []
    for i in range(C):
        pi, ti = p[:, i], t[:, i]
        inter = jnp.sum(pi * ti)
        d = (2.0 * inter + 1.0) / (jnp.sum(pi * pi) + jnp.sum(ti * ti) + 1.0)
        dices.append(1.0 - d)
    loss_ed = sum(dices) / C

    x = sur_inputs.reshape(-1).astype(jnp.float32)
    tt = sur_target.astype(jnp.float32)
    valid = ((pseudo == 2) & ((x < tt) | (alive == 0))).astype(jnp.float32)
    pm = (pseudo == 1).astype(jnp.float32)

    def masked_mean(vals, mask):
        return jnp.sum(vals * mask) / jnp.maximum(jnp.sum(mask), 1.0)

    sq = (x - tt) ** 2
    loss_mse = masked_mean(sq, valid) + 0.5 * masked_mean(sq, pm)

    oh = jnp.stack([(tt >= 0) & (tt < 300), (tt >= 300) & (tt < 450), tt >= 450],
                   axis=1).astype(jnp.float32)
    logp = jax.nn.log_softmax(type_logits.astype(jnp.float32), axis=1)
    ce = -jnp.sum(oh * logp, axis=1)
    loss_type = masked_mean(ce, valid) + 0.5 * masked_mean(ce, pm)

    loss = loss_mse * weight[1] + loss_ed * weight[2] + loss_type * weight[0]
    return loss, loss_mse, loss_ed, loss_type


if __name__ == "__main__":
    key = jax.random.PRNGKey(0)
    k1, k2, k3, k4, k5 = jax.random.split(key, 5)

    B, C, H, W = 2, 3, 16, 32     # 3 channels = ['ET', 'TC', 'WT']
    N = 8                         # survival batch

    seg_input = jax.random.normal(k1, (B, C, H, W), dtype=jnp.float32)
    seg_target = jax.random.bernoulli(k2, 0.3, (B, C, H, W)).astype(jnp.float32)

    sur_inputs = jax.random.uniform(k3, (N, 1), minval=50.0, maxval=550.0)
    sur_target = jax.random.uniform(k4, (N,), minval=50.0, maxval=550.0)
    type_logits = jax.random.normal(k5, (N, 3), dtype=jnp.float32)
    sur_target_label = jnp.zeros((N, 3), jnp.float32)      # unused by forward
    bins = jnp.linspace(0.0, 700.0, N)                     # unused by forward
    alive = jnp.array([1, 0, 1, 1, 0, 1, 0, 1], jnp.float32)
    pseudo = jnp.array([2, 2, 1, 1, 2, 0, 1, 2], jnp.float32)
    weight = jnp.array([0.3, 0.4, 0.3], jnp.float32)

    loss, loss_mse, loss_ed, loss_type = fuse_loss(
        seg_input, seg_target, sur_inputs, sur_target, type_logits,
        sur_target_label, alive, bins, pseudo, weight)
    jax.block_until_ready(loss)

    ref = _ref_fuse_loss(seg_input, seg_target, sur_inputs, sur_target,
                         type_logits, alive, pseudo, weight)
    for got, want in zip((loss, loss_mse, loss_ed, loss_type), ref):
        assert jnp.allclose(got, want, rtol=1e-3, atol=1e-2), (got, want)

    print("KERNEL_OK")
</pallas_src>

<mosaic_0001>
module attributes {stable_mosaic.version = 11 : i64} {
  func.func @_dice_partial_kernel(%arg0: i32, %arg1: i32, %arg2: i32, %arg3: memref<1x1x16x32xf32, #tpu.memory_space<vmem>>, %arg4: memref<1x1x16x32xf32, #tpu.memory_space<vmem>>, %arg5: memref<1x1x3x128xf32, #tpu.memory_space<vmem>>) attributes {dimension_semantics = [#tpu.dimension_semantics<parallel>, #tpu.dimension_semantics<parallel>, #tpu.dimension_semantics<parallel>], iteration_bounds = array<i64: 3, 2, 1>, scalar_prefetch = 0 : i64, scratch_operands = 0 : i64, tpu.core_type = #tpu.core_type<tc>, window_params = [{transform_indices = @transform_0, window_bounds = array<i64: 1, 1, 16, 32>}, {transform_indices = @transform_1, window_bounds = array<i64: 1, 1, 16, 32>}, {transform_indices = @transform_2, window_bounds = array<i64: 1, 1, 3, 128>}]} {
    %c0 = arith.constant 0 : index
    %c0_0 = arith.constant 0 : index
    %c0_1 = arith.constant 0 : index
    %c0_2 = arith.constant 0 : index
    %0 = vector.load %arg3[%c0, %c0_0, %c0_1, %c0_2] : memref<1x1x16x32xf32, #tpu.memory_space<vmem>>, vector<1x1x16x32xf32>
    %1 = arith.negf %0 : vector<1x1x16x32xf32>
    %2 = math.exp %1 : vector<1x1x16x32xf32>
    %cst = arith.constant 1.000000e+00 : f32
    %3 = vector.broadcast %cst : f32 to vector<1x1x16x32xf32>
    %4 = arith.addf %3, %2 : vector<1x1x16x32xf32>
    %5 = arith.divf %3, %4 : vector<1x1x16x32xf32>
    %c0_3 = arith.constant 0 : index
    %c0_4 = arith.constant 0 : index
    %c0_5 = arith.constant 0 : index
    %c0_6 = arith.constant 0 : index
    %6 = vector.load %arg4[%c0_3, %c0_4, %c0_5, %c0_6] : memref<1x1x16x32xf32, #tpu.memory_space<vmem>>, vector<1x1x16x32xf32>
    %7 = arith.mulf %5, %6 : vector<1x1x16x32xf32>
    %8 = vector.shape_cast %7 : vector<1x1x16x32xf32> to vector<1x1x1x16x32xf32>
    %cst_7 = arith.constant dense<0.000000e+00> : vector<1xf32>
    %9 = vector.multi_reduction <add>, %8, %cst_7 [1, 2, 3, 4] : vector<1x1x1x16x32xf32> to vector<1xf32>
    %10 = vector.shape_cast %9 : vector<1xf32> to vector<1x1x1x1x1xf32>
    %11 = vector.extract %10[0, 0, 0, 0, 0] : f32 from vector<1x1x1x1x1xf32>
    %12 = arith.mulf %5, %5 : vector<1x1x16x32xf32>
    %13 = vector.shape_cast %12 : vector<1x1x16x32xf32> to vector<1x1x1x16x32xf32>
    %cst_8 = arith.constant dense<0.000000e+00> : vector<1xf32>
    %14 = vector.multi_reduction <add>, %13, %cst_8 [1, 2, 3, 4] : vector<1x1x1x16x32xf32> to vector<1xf32>
    %15 = vector.shape_cast %14 : vector<1xf32> to vector<1x1x1x1x1xf32>
    %16 = vector.extract %15[0, 0, 0, 0, 0] : f32 from vector<1x1x1x1x1xf32>
    %17 = arith.mulf %6, %6 : vector<1x1x16x32xf32>
    %18 = vector.shape_cast %17 : vector<1x1x16x32xf32> to vector<1x1x1x16x32xf32>
    %cst_9 = arith.constant dense<0.000000e+00> : vector<1xf32>
    %19 = vector.multi_reduction <add>, %18, %cst_9 [1, 2, 3, 4] : vector<1x1x1x16x32xf32> to vector<1xf32>
    %20 = vector.shape_cast %19 : vector<1xf32> to vector<1x1x1x1x1xf32>
    %21 = vector.extract %20[0, 0, 0, 0, 0] : f32 from vector<1x1x1x1x1xf32>
    %22 = tpu.iota {dimensions = array<i32: 2>} : vector<1x1x3x128xi32>
    %c0_i32 = arith.constant 0 : i32
    %23 = vector.broadcast %c0_i32 : i32 to vector<1x1x3x128xi32>
    %24 = arith.cmpi eq, %22, %23 : vector<1x1x3x128xi32>
    %c1_i32 = arith.constant 1 : i32
    %25 = vector.broadcast %c1_i32 : i32 to vector<1x1x3x128xi32>
    %26 = arith.cmpi eq, %22, %25 : vector<1x1x3x128xi32>
    %27 = vector.broadcast %16 : f32 to vector<1x1x3x128xf32>
    %28 = vector.broadcast %21 : f32 to vector<1x1x3x128xf32>
    %29 = arith.select %26, %27, %28 : vector<1x1x3x128xi1>, vector<1x1x3x128xf32>
    %30 = vector.broadcast %11 : f32 to vector<1x1x3x128xf32>
    %31 = arith.select %24, %30, %29 : vector<1x1x3x128xi1>, vector<1x1x3x128xf32>
    %c0_10 = arith.constant 0 : index
    %c0_11 = arith.constant 0 : index
    %c0_12 = arith.constant 0 : index
    %c0_13 = arith.constant 0 : index
    %32 = vector.load %arg5[%c0_10, %c0_11, %c0_12, %c0_13] : memref<1x1x3x128xf32, #tpu.memory_space<vmem>>, vector<1x1x3x128xf32>
    tpu.vector_store %arg5[%c0_10, %c0_11, %c0_12, %c0_13], %31 {strides = array<i32>} : memref<1x1x3x128xf32, #tpu.memory_space<vmem>>, vector<1x1x3x128xf32>,
    return
  }
  func.func @transform_0(%arg0: i32, %arg1: i32, %arg2: i32) -> (i32, i32, i32, i32) {
    %c0_i32 = arith.constant 0 : i32
    %c0_i32_0 = arith.constant 0 : i32
    return %arg1, %arg0, %arg2, %c0_i32 : i32, i32, i32, i32
  }
  func.func @transform_1(%arg0: i32, %arg1: i32, %arg2: i32) -> (i32, i32, i32, i32) {
    %c0_i32 = arith.constant 0 : i32
    %c0_i32_0 = arith.constant 0 : i32
    return %arg1, %arg0, %arg2, %c0_i32 : i32, i32, i32, i32
  }
  func.func @transform_2(%arg0: i32, %arg1: i32, %arg2: i32) -> (i32, i32, i32, i32) {
    %c1_i32 = arith.constant 1 : i32
    %0 = arith.muli %arg1, %c1_i32 : i32
    %1 = arith.addi %0, %arg2 : i32
    %c0_i32 = arith.constant 0 : i32
    %c0_i32_0 = arith.constant 0 : i32
    %c0_i32_1 = arith.constant 0 : i32
    return %arg0, %1, %c0_i32, %c0_i32_0 : i32, i32, i32, i32
  }
}

</mosaic_0001>

<llo_original>
// kernel: fuse_loss.1
$region0: #{fuse_loss.1}
  #allocation0 [shape = 'u32[]', space=smem, size = 0x4, offset = 0x4, fixed_abs, tag = 'smem constant byte address 0x4 - core index']
  #allocation1 [shape = 'u32[72,128]{1,0:T(1,128)}', space=vmem, size = 0x9000, scoped, tag = 'internal scratch']
  %s0 = inlined_call_operand.hbm [shape: f32[2,3,16,32], index: 0, kind: input, shape index: {}]
  %s1 = inlined_call_operand.hbm [shape: f32[2,3,16,32], index: 1, kind: input, shape index: {}]
  %s2 = inlined_call_operand.vmem [shape: f32[3,2,3,128], index: 2, kind: output, shape index: {}]
  %s3 = sld [smem:[#allocation0]]
  $region49: #{fuse_loss.1} parent=0
    _
  %s5 = ssub.s32 1, %s3
  %s6 = scalar_select 0, %s5, %s3
  $region1: #{fuse_loss.1} parent=0
    #allocation2 [shape = 'u8[16384]{0}', space=vmem, size = 0x4000, scoped, tag = 'input window, operand 0']
    #allocation3 [shape = 's32[2]{0}', space=sflag, size = 0x8, scoped, tag = 'scoped memory for fuse_loss.1']
    #allocation4 [shape = 'u8[16384]{0}', space=vmem, size = 0x4000, scoped, tag = 'input window, operand 1']
    #allocation5 [shape = 's32[2]{0}', space=sflag, size = 0x8, scoped, tag = 'scoped memory for fuse_loss.1']
    %7 = vsyncpa [#allocation3], 0
    %s8 = scalar_lea.sflag [#allocation3], 1
    %9 = vsyncpa %s8, 0
    %10 = vsyncpa [#allocation5], 0
    %s11 = scalar_lea.sflag [#allocation5], 1
    %12 = vsyncpa %s11, 0
    loop: start=0, step=1, limit=8
    $region2: #{fuse_loss.1} parent=1 // loop_pre_header
      _
    $region3: #{fuse_loss.1} parent=1 // loop_header
      %s14 = sphi 0, %s18
      %p15 = scmp.ge.s32.totalorder %s14, 8
      %s21 = sphi 0, %s40
      %s22 = sphi 0, %s36
      %s23 = sphi 0, %s32
      %s24 = sphi 0, %s21
      %s25 = sphi 0, %s22
      %s26 = sphi 0, %s23
      %s27 = sphi 0, %s24
      %s28 = sphi 0, %s25
      %s29 = sphi 0, %s26
      %s47 = sphi 0, %s49
      %s50 = sphi 0, %s47
      %s51 = sphi 0, %s50
      %s67 = sphi 0, %s51
      %s77 = sphi 0, %s79
      %s80 = sphi 0, %s77
      %s81 = sphi 0, %s80
      %s97 = sphi 0, %s81
      %s107 = sphi 0, %s109
      %s110 = sphi 0, %s107
      %s111 = sphi 0, %s110
      %s127 = sphi 0, %s111
    $region4: #{fuse_loss.1} parent=1 // loop_header_branch
      %17 = sbr.rel (%p15) target = $region8
    $region5: #{fuse_loss.1} parent=1 // loop_body
      %s19 = ssub.s32 %s14, 1
      %s20 = ssub.s32 %s14, 2
      %s30 = sadd.s32 1, %s23
      %p31 = scmp.ge.s32.totalorder %s30, 1
      %s32 = scalar_select %p31, 0, %s30
      %s33 = sadd.s32 1, %s22
      %s34 = scalar_select %p31, %s33, %s22
      %p35 = scmp.ge.s32.totalorder %s34, 2
      %s36 = scalar_select %p35, 0, %s34
      %s37 = sadd.s32 1, %s21
      %s38 = scalar_select %p35, %s37, %s21
      %p39 = scmp.ge.s32.totalorder %s38, 3
      %s40 = scalar_select %p39, 0, %s38
      %s41 = ssub.s32 %s22, %s36
      %s42 = ssub.s32 %s21, %s40
      %s43 = sor.u32 %s41, %s42
      %s44 = ssub.s32 %s23, %s32
      %s45 = sor.u32 %s43, %s44
      %p46 = scmp.eq.s32.totalorder %s45, 0
      %s48 = sadd.s32 %s47, 1
      %s49 = scalar_select %p46, %s47, %s48
      %p52 = pneg %p46
      %p53 = scmp.eq.s32.totalorder %s14, 5
      %p54 = por %p52, %p53
      %p55 = scmp.ne.s32.totalorder %s47, %s50
      %p56 = scmp.eq.s32.totalorder %s14, 0
      %p57 = por %p55, %p56
      %p58 = scmp.ne.s32.totalorder %s47, %s50
      %p59 = scmp.eq.s32.totalorder %s19, 5
      %p60 = por %p58, %p59
      %p61 = scmp.ne.s32.totalorder %s50, %s51
      %p62 = scmp.eq.s32.totalorder %s19, 0
      %p63 = por %p61, %p62
      %p64 = scmp.ne.s32.totalorder %s50, %s51
      %p65 = scmp.eq.s32.totalorder %s20, 5
      %p66 = por %p64, %p65
      %p68 = scmp.ne.s32.totalorder %s51, %s67
      %p69 = scmp.eq.s32.totalorder %s20, 0
      %p70 = por %p68, %p69
      %s71 = ssub.s32 %s22, %s36
      %s72 = ssub.s32 %s21, %s40
      %s73 = sor.u32 %s71, %s72
      %s74 = ssub.s32 %s23, %s32
      %s75 = sor.u32 %s73, %s74
      %p76 = scmp.eq.s32.totalorder %s75, 0
      %s78 = sadd.s32 %s77, 1
      %s79 = scalar_select %p76, %s77, %s78
      %p82 = pneg %p76
      %p83 = scmp.eq.s32.totalorder %s14, 5
      %p84 = por %p82, %p83
      %p85 = scmp.ne.s32.totalorder %s77, %s80
      %p86 = scmp.eq.s32.totalorder %s14, 0
      %p87 = por %p85, %p86
      %p88 = scmp.ne.s32.totalorder %s77, %s80
      %p89 = scmp.eq.s32.totalorder %s19, 5
      %p90 = por %p88, %p89
      %p91 = scmp.ne.s32.totalorder %s80, %s81
      %p92 = scmp.eq.s32.totalorder %s19, 0
      %p93 = por %p91, %p92
      %p94 = scmp.ne.s32.totalorder %s80, %s81
      %p95 = scmp.eq.s32.totalorder %s20, 5
      %p96 = por %p94, %p95
      %p98 = scmp.ne.s32.totalorder %s81, %s97
      %p99 = scmp.eq.s32.totalorder %s20, 0
      %p100 = por %p98, %p99
      %s101 = sadd.s32 %s22, %s23
      %s102 = sadd.s32 %s36, %s32
      %s103 = ssub.s32 %s21, %s40
      %s104 = ssub.s32 %s101, %s102
      %s105 = sor.u32 %s103, %s104
      %p106 = scmp.eq.s32.totalorder %s105, 0
      %s108 = sadd.s32 %s107, 1
      %s109 = scalar_select %p106, %s107, %s108
      %p112 = pneg %p106
      %p113 = scmp.eq.s32.totalorder %s14, 5
      %p114 = por %p112, %p113
      %p115 = scmp.ne.s32.totalorder %s107, %s110
      %p116 = scmp.eq.s32.totalorder %s14, 0
      %p117 = por %p115, %p116
      %p118 = scmp.ne.s32.totalorder %s107, %s110
      %p119 = scmp.eq.s32.totalorder %s19, 5
      %p120 = por %p118, %p119
      %p121 = scmp.ne.s32.totalorder %s110, %s111
      %p122 = scmp.eq.s32.totalorder %s19, 0
      %p123 = por %p121, %p122
      %p124 = scmp.ne.s32.totalorder %s110, %s111
      %p125 = scmp.eq.s32.totalorder %s20, 5
      %p126 = por %p124, %p125
      %p128 = scmp.ne.s32.totalorder %s111, %s127
      %p129 = scmp.eq.s32.totalorder %s20, 0
      %p130 = por %p128, %p129
      %p131 = scmp.le.s32.totalorder 1, %s14
      %p132 = scmp.lt.s32.totalorder %s14, 7
      %p133 = pnand %p131, %p132
      %p134 = pneg %p133
      // Predicated region
      $region9: #{fuse_loss.1} parent=5 // pred_check
        _
      $region10: #{fuse_loss.1} parent=5 // pred_check_branch
        %136 = sbr.rel (%p133) target = $region12
      $region11: #{fuse_loss.1} parent=5 // pred_region
        %s137 = ssub.s32 %s14, 1
      $region12: #{fuse_loss.1} parent=5 // pred_fallthru
        _
      %p138 = scmp.lt.s32.totalorder %s14, 6
      // Predicated region
      $region13: #{fuse_loss.1} parent=5 // pred_check
        %p139 = pneg %p138
      $region14: #{fuse_loss.1} parent=5 // pred_check_branch
        %141 = sbr.rel (%p139) target = $region16
      $region15: #{fuse_loss.1} parent=5 // pred_region
        // Predicated region
        $region17: #{fuse_loss.1} parent=15 // pred_check
          %p142 = pneg %p57
        $region18: #{fuse_loss.1} parent=15 // pred_check_branch
          %144 = sbr.rel (%p142) target = $region20
        $region19: #{fuse_loss.1} parent=15 // pred_region
          %s145 = sand.u32 %s47, 1
          %s146 = scalar_lea.sflag [#allocation3], %s145
          %s147 = sand.u32 %s47, 1
          %s148 = smul.addr %s147, 16
          %s149 = scalar_lea.vmem [#allocation2], %s148
          %s150 = smul.u32 2, %s23
          %152 = vsyncadd %s146, 0
          %s153 = smul.addr %s21, 2
          %s154 = sadd.s32 %s150, %s153
          %s155 = smul.addr %s22, 6
          %s156 = sadd.s32 %s154, %s155
          %s157 = smul.addr %s156, 8
          %s158 = scalar_lea.hbm %s0, %s157
          %s159 = sshll.u32 %s158, 4
          %s160 = int_to_ptr.hbm [resolvable:$true] %s159
          %s161 = sshll.u32 %s149, 4
          %s162 = int_to_ptr.vmem [resolvable:$true] %s161
          %167 = dma.hbm_to_vmem [thread:$0]  %s160, 256, %s162, %s146, 128, 128, 8
        $region20: #{fuse_loss.1} parent=15 // pred_fallthru
          _
        // Predicated region
        $region21: #{fuse_loss.1} parent=15 // pred_check
          %p168 = pneg %p87
        $region22: #{fuse_loss.1} parent=15 // pred_check_branch
          %170 = sbr.rel (%p168) target = $region24
        $region23: #{fuse_loss.1} parent=15 // pred_region
          %s171 = sand.u32 %s77, 1
          %s172 = scalar_lea.sflag [#allocation5], %s171
          %s173 = sand.u32 %s77, 1
          %s174 = smul.addr %s173, 16
          %s175 = scalar_lea.vmem [#allocation4], %s174
          %s176 = smul.u32 2, %s23
          %178 = vsyncadd %s172, 0
          %s179 = smul.addr %s21, 2
          %s180 = sadd.s32 %s176, %s179
          %s181 = smul.addr %s22, 6
          %s182 = sadd.s32 %s180, %s181
          %s183 = smul.addr %s182, 8
          %s184 = scalar_lea.hbm %s1, %s183
          %s185 = sshll.u32 %s184, 4
          %s186 = int_to_ptr.hbm [resolvable:$true] %s185
          %s187 = sshll.u32 %s175, 4
          %s188 = int_to_ptr.vmem [resolvable:$true] %s187
          %193 = dma.hbm_to_vmem [thread:$0]  %s186, 256, %s188, %s172, 128, 128, 8
        $region24: #{fuse_loss.1} parent=15 // pred_fallthru
          _
      $region16: #{fuse_loss.1} parent=5 // pred_fallthru
        _
      %p194 = scmp.le.s32.totalorder 1, %s14
      %p195 = scmp.lt.s32.totalorder %s14, 7
      %p196 = pnand %p194, %p195
      %p197 = pneg %p196
      // Predicated region
      $region25: #{fuse_loss.1} parent=5 // pred_check
        _
      $region26: #{fuse_loss.1} parent=5 // pred_check_branch
        %199 = sbr.rel (%p196) target = $region28
      $region27: #{fuse_loss.1} parent=5 // pred_region
        %s200 = ssub.s32 %s14, 1
        %s201 = sand.u32 %s50, 1
        %s202 = scalar_lea.sflag [#allocation3], %s201
        %s203 = sand.u32 %s50, 1
        %s204 = smul.addr %s203, 16
        %s205 = scalar_lea.vmem [#allocation2], %s204
        // Predicated region
        $region29: #{fuse_loss.1} parent=27 // pred_check
          %p206 = pneg %p63
        $region30: #{fuse_loss.1} parent=27 // pred_check_branch
          %208 = sbr.rel (%p206) target = $region32
        $region31: #{fuse_loss.1} parent=27 // pred_region
          %210 = dma.done %s202, 256
        $region32: #{fuse_loss.1} parent=27 // pred_fallthru
          _
        %s211 = sand.u32 %s80, 1
        %s212 = scalar_lea.sflag [#allocation5], %s211
        %s213 = sand.u32 %s80, 1
        %s214 = smul.addr %s213, 16
        %s215 = scalar_lea.vmem [#allocation4], %s214
        // Predicated region
        $region33: #{fuse_loss.1} parent=27 // pred_check
          %p216 = pneg %p93
        $region34: #{fuse_loss.1} parent=27 // pred_check_branch
          %218 = sbr.rel (%p216) target = $region36
        $region35: #{fuse_loss.1} parent=27 // pred_region
          %220 = dma.done %s212, 256
        $region36: #{fuse_loss.1} parent=27 // pred_fallthru
          _
        %s221 = sand.u32 %s50, 1
        %s222 = scalar_lea.sflag [#allocation3], %s221
        %s223 = sand.u32 %s50, 1
        %s224 = smul.addr %s223, 16
        %s225 = scalar_lea.vmem [#allocation2], %s224
        %p226 = pneg %p63
        %p227 = pneg %p60
        %s228 = sand.u32 %s80, 1
        %s229 = scalar_lea.sflag [#allocation5], %s228
        %s230 = sand.u32 %s80, 1
        %s231 = smul.addr %s230, 16
        %s232 = scalar_lea.vmem [#allocation4], %s231
        %p233 = pneg %p93
        %p234 = pneg %p90
        %p235 = pneg %p123
        %p236 = pneg %p120
        %s237 = sadd.s32 %s25, %s26
        %p238 = scmp.lt.s32.totalorder %s24, 2
        %s239 = scalar_select %p238, %s24, 2
        %p240 = scmp.lt.s32.totalorder %s237, 1
        %s241 = scalar_select %p240, %s237, 1
        %s242 = smul.addr %s239, 2
        %s243 = sadd.s32 %s241, %s242
        %s244 = smul.addr %s243, 4
        %s245 = scalar_lea.vmem %s2, %s244
        %s246 = smul.u32 2, %s26
        %s247 = smul.u32 2, %s26
        %s248 = sadd.s32 %s25, %s26
        %p249 = scmp.lt.s32.totalorder %s24, 2
        %s250 = scalar_select %p249, %s24, 2
        %p251 = scmp.lt.s32.totalorder %s248, 1
        %s252 = scalar_select %p251, %s248, 1
        %s253 = smul.addr %s250, 2
        %s254 = sadd.s32 %s252, %s253
        %s255 = smul.addr %s254, 4
        %s256 = scalar_lea.vmem %s2, %s255
        %s257 = sadd.s32 %s25, %s26
        %v258 = vld [vmem:[%s205] sm:$0xff]
        %v259 = vld [vmem:[%s205 + $0x8] sm:$0xff]
        %v260 = vxor.u32 %v258, 2147483648
        %v261 = vxor.u32 %v259, 2147483648
        %v262 = vmul.f32 %v260, 1.442695
        %v263 = vpow.pop %v262
        %v264 = vmul.f32 %v261, 1.442695
        %v265 = vpow.pop %v264
        %v266 = vadd.f32 %v263, 1.0
        %v267 = vadd.f32 %v265, 1.0
        %v268 = vrcp.pop %v266
        %v269 = vmul.f32 %v266, %v268
        %v270 = vsub.f32 1.0, %v269
        %v271 = vmul.f32 %v268, %v270
        %v272 = vadd.f32 %v268, %v271
        %vm273 = vweird.f32 %v266
        %vm274 = vweird.f32 %v268
        %vm275 = vmor %vm273, %vm274
        %v276 = vsel %vm275, %v268, %v272
        %v277 = vand.u32 2147483647, %v266
        %vm278 = vcmp.eq.f32.partialorder %v277, 8.507059e+37
        %v279 = vand.u32 %v266, 2147483648
        %v280 = vor.u32 1.1754944e-38, %v279
        %v281 = vsel %vm278, %v280, %v276
        %v282 = vmul.f32 1.0, %v281
        %v283 = vrcp.pop %v267
        %v284 = vmul.f32 %v267, %v283
        %v285 = vsub.f32 1.0, %v284
        %v286 = vmul.f32 %v283, %v285
        %v287 = vadd.f32 %v283, %v286
        %vm288 = vweird.f32 %v267
        %vm289 = vweird.f32 %v283
        %vm290 = vmor %vm288, %vm289
        %v291 = vsel %vm290, %v283, %v287
        %v292 = vand.u32 2147483647, %v267
        %vm293 = vcmp.eq.f32.partialorder %v292, 8.507059e+37
        %v294 = vand.u32 %v267, 2147483648
        %v295 = vor.u32 1.1754944e-38, %v294
        %v296 = vsel %vm293, %v295, %v291
        %v297 = vmul.f32 1.0, %v296
        %v298 = vld [vmem:[%s215] sm:$0xff]
        %v299 = vld [vmem:[%s215 + $0x8] sm:$0xff]
        %v300 = vmul.f32 %v282, %v298
        %v301 = vmul.f32 %v297, %v299
        %vm302 = vcmask 261120
        %v303 = vsel %vm302, %v300, 0.0
        %v304 = vsel %vm302, %v301, 0.0
        %v305 = vadd.f32 %v303, %v304
        %306 = vadd.xlane.f32.xlu0 %v305
        %v307 = vpop.xlane.xlu0 %306
        %v308 = vrot.slane %v307, 4
        %v309 = vadd.f32 %v307, %v308
        %v310 = vrot.slane %v309, 2
        %v311 = vadd.f32 %v309, %v310
        %v312 = vrot.slane %v311, 1
        %v313 = vadd.f32 %v311, %v312
        %s314 = vtos %v313
        %v315 = vmul.f32 %v282, %v282
        %v316 = vmul.f32 %v297, %v297
        %v317 = vsel %vm302, %v315, 0.0
        %v318 = vsel %vm302, %v316, 0.0
        %v319 = vadd.f32 %v317, %v318
        %320 = vadd.xlane.f32.xlu0 %v319
        %v321 = vpop.xlane.xlu0 %320
        %v322 = vrot.slane %v321, 4
        %v323 = vadd.f32 %v321, %v322
        %v324 = vrot.slane %v323, 2
        %v325 = vadd.f32 %v323, %v324
        %v326 = vrot.slane %v325, 1
        %v327 = vadd.f32 %v325, %v326
        %s328 = vtos %v327
        %v329 = vmul.f32 %v298, %v298
        %v330 = vmul.f32 %v299, %v299
        %v331 = vsel %vm302, %v329, 0.0
        %v332 = vsel %vm302, %v330, 0.0
        %v333 = vadd.f32 %v331, %v332
        %334 = vadd.xlane.f32.xlu0 %v333
        %v335 = vpop.xlane.xlu0 %334
        %v336 = vrot.slane %v335, 4
        %v337 = vadd.f32 %v335, %v336
        %v338 = vrot.slane %v337, 2
        %v339 = vadd.f32 %v337, %v338
        %v340 = vrot.slane %v339, 1
        %v341 = vadd.f32 %v339, %v340
        %s342 = vtos %v341
        %v343 = vlaneseq
        %v344 = vshrl.u32 %v343, 7
        %vm345 = vcmp.eq.s32.totalorder %v344, 0
        %vm346 = vcmp.eq.s32.totalorder %v344, 1
        %v347 = vstv %s328
        %v348 = vstv %s342
        %v349 = vsel %vm346, %v347, %v348
        %v350 = vstv %s314
        %v351 = vsel %vm345, %v350, %v349
        %352 = vst [vmem:[%s256] sm:$0x7] %v351
        %s353 = sadd.s32 %s25, %s26
        %p354 = scmp.lt.s32.totalorder %s24, 2
        %s355 = scalar_select %p354, %s24, 2
        %p356 = scmp.lt.s32.totalorder %s353, 1
        %s357 = scalar_select %p356, %s353, 1
        %s358 = smul.addr %s355, 2
        %s359 = sadd.s32 %s357, %s358
        %s360 = smul.addr %s359, 4
        %s361 = scalar_lea.vmem %s2, %s360
        // Predicated region
        $region37: #{fuse_loss.1} parent=27 // pred_check
          %p362 = pneg %p120
        $region38: #{fuse_loss.1} parent=27 // pred_check_branch
          %364 = sbr.rel (%p362) target = $region40
        $region39: #{fuse_loss.1} parent=27 // pred_region
          %s365 = sadd.s32 %s25, %s26
        $region40: #{fuse_loss.1} parent=27 // pred_fallthru
          _
      $region28: #{fuse_loss.1} parent=5 // pred_fallthru
        _
      %p366 = scmp.le.s32.totalorder 2, %s14
      // Predicated region
      $region41: #{fuse_loss.1} parent=5 // pred_check
        %p367 = pneg %p366
      $region42: #{fuse_loss.1} parent=5 // pred_check_branch
        %369 = sbr.rel (%p367) target = $region44
      $region43: #{fuse_loss.1} parent=5 // pred_region
        %s370 = ssub.s32 %s14, 2
        // Predicated region
        $region45: #{fuse_loss.1} parent=43 // pred_check
          %p371 = pneg %p126
        $region46: #{fuse_loss.1} parent=43 // pred_check_branch
          %373 = sbr.rel (%p371) target = $region48
        $region47: #{fuse_loss.1} parent=43 // pred_region
          %s374 = sadd.s32 %s28, %s29
          %p375 = scmp.lt.s32.totalorder %s27, 2
          %s376 = scalar_select %p375, %s27, 2
          %p377 = scmp.lt.s32.totalorder %s374, 1
          %s378 = scalar_select %p377, %s374, 1
          %s379 = smul.addr %s376, 2
          %s380 = sadd.s32 %s378, %s379
          %s381 = smul.addr %s380, 4
          %s382 = scalar_lea.vmem %s2, %s381
        $region48: #{fuse_loss.1} parent=43 // pred_fallthru
          _
      $region44: #{fuse_loss.1} parent=5 // pred_fallthru
        _
    $region6: #{fuse_loss.1} parent=1 // loop_footer
      %s18 = sadd.s32 1, %s14
    $region7: #{fuse_loss.1} parent=1 // loop_footer_branch
      %13 = sbr.rel target = $region3
    $region8: #{fuse_loss.1} parent=1 // loop_exit
      _
    %383 = vsyncpa [#allocation3], 1
    %s384 = scalar_lea.sflag [#allocation3], 1
    %385 = vsyncpa %s384, 1
    %386 = vsyncpa [#allocation5], 1
    %s387 = scalar_lea.sflag [#allocation5], 1
    %388 = vsyncpa %s387, 1

</llo_original>
